<compile_context>
chip_gen: v5e
topology: v5e:2x2
jax: 0.10.0
libtpu: 0.0.40
codegen_flags: <defaults>
</compile_context>

<pallas_src>
import jax
import jax.numpy as jnp
from jax.experimental import pallas as pl
from jax.experimental.pallas import tpu as pltpu

LOG_STD_MAX = 2.0
LOG_STD_MIN = -20.0


def _softplus(x):
    # numerically-stable softplus, all VPU/EUP ops
    return jnp.maximum(x, 0.0) + jnp.log1p(jnp.exp(-jnp.abs(x)))


def actor_kernel(obs_ref, eps_ref,
                 w1_ref, b1_ref, w2_ref, b2_ref,
                 wh_ref, bh_ref,
                 out_ref):
    act_dim = eps_ref.shape[-1]
    x = obs_ref[...]

    # --- MLP trunk (activation = ReLU, applied after every layer incl. the last) ---
    h = jnp.dot(x, w1_ref[...], preferred_element_type=jnp.float32) + b1_ref[...]
    h = jnp.maximum(h, 0.0)
    h = jnp.dot(h, w2_ref[...], preferred_element_type=jnp.float32) + b2_ref[...]
    h = jnp.maximum(h, 0.0)

    # --- fused heads: one matmul producing [mu | log_std] ---
    y = jnp.dot(h, wh_ref[...], preferred_element_type=jnp.float32) + bh_ref[...]
    mu = y[:, :act_dim]
    log_std = jnp.clip(y[:, act_dim:], LOG_STD_MIN, LOG_STD_MAX)
    std = jnp.exp(log_std)

    # --- rsample ---
    eps = eps_ref[...]
    a = mu + std * eps

    # --- Normal(mu, std).log_prob(a).sum(-1) ---
    # (a - mu) / std == eps exactly (by construction), so use eps directly:
    # removes a vector divide and avoids catastrophic cancellation.
    log_prob = -0.5 * eps * eps - log_std - 0.5 * jnp.log(2.0 * jnp.pi)
    logp_pi = jnp.sum(log_prob, axis=-1, keepdims=True)

    # --- tanh-squash correction: 2*(log2 - a - softplus(-2a)), summed over act_dim ---
    corr = 2.0 * (jnp.log(2.0) - a - _softplus(-2.0 * a))
    logp_pi = logp_pi - jnp.sum(corr, axis=-1, keepdims=True)

    # --- act_dim == 2 branch: tanh squash; pack [pi | logp] into one lane-contiguous slab ---
    out_ref[...] = jnp.concatenate([jnp.tanh(a), logp_pi], axis=-1)


def _round_up(x, m):
    return ((x + m - 1) // m) * m


def squashed_gaussian_actor(obs, eps, params, *, block_b=512):
    """obs: (B, obs_dim) f32, eps: (B, act_dim) f32 standard-normal noise.

    Returns (pi_action (B, act_dim), logp_pi (B,)) matching the torch module's
    deterministic=False / with_logprob=True / act_dim==2 path.
    """
    B, obs_dim = obs.shape
    act_dim = params["wmu"].shape[1]

    # Fuse the two heads into one weight/bias so the head section is a single matmul.
    w_heads = jnp.concatenate([params["wmu"], params["wls"]], axis=1)   # (hidden, 2*act_dim)
    b_heads = jnp.concatenate([params["bmu"], params["bls"]], axis=1)   # (1, 2*act_dim)

    # Batch tiling: multiple-of-8 tile, pad B up so the grid divides evenly.
    tb = min(block_b, _round_up(B, 8))
    b_padded = _round_up(B, tb)
    if b_padded != B:
        pad = b_padded - B
        obs = jnp.pad(obs, ((0, pad), (0, 0)))
        eps = jnp.pad(eps, ((0, pad), (0, 0)))
    n_tiles = b_padded // tb

    tiled = lambda d: pl.BlockSpec((tb, d), lambda i: (i, 0))
    resident = lambda shape: pl.BlockSpec(shape, lambda i: (0, 0))   # same block every step -> stays in VMEM

    packed = pl.pallas_call(
        actor_kernel,
        out_shape=jax.ShapeDtypeStruct((b_padded, act_dim + 1), jnp.float32),
        grid=(n_tiles,),
        in_specs=[
            tiled(obs_dim),
            tiled(act_dim),
            resident(params["w1"].shape), resident(params["b1"].shape),
            resident(params["w2"].shape), resident(params["b2"].shape),
            resident(w_heads.shape), resident(b_heads.shape),
        ],
        out_specs=pl.BlockSpec((tb, act_dim + 1), lambda i: (i, 0)),
        compiler_params=pltpu.CompilerParams(
            dimension_semantics=("parallel",),   # shards batch tiles across v7x's 2 TCs
        ),
    )(obs, eps,
      params["w1"], params["b1"], params["w2"], params["b2"],
      w_heads, b_heads)

    packed = packed[:B]
    return packed[:, :act_dim], packed[:, act_dim]


def init_params(key, obs_dim, hidden_sizes, act_dim):
    """Deterministic synthetic weights. Weights are (in, out); biases are (1, out)."""
    sizes = [obs_dim] + list(hidden_sizes)
    keys = jax.random.split(key, 8)
    p = {}
    p["w1"] = jax.random.normal(keys[0], (sizes[0], sizes[1]), jnp.float32) * 0.1
    p["b1"] = jax.random.normal(keys[1], (1, sizes[1]), jnp.float32) * 0.01
    p["w2"] = jax.random.normal(keys[2], (sizes[1], sizes[2]), jnp.float32) * 0.1
    p["b2"] = jax.random.normal(keys[3], (1, sizes[2]), jnp.float32) * 0.01
    p["wmu"] = jax.random.normal(keys[4], (sizes[2], act_dim), jnp.float32) * 0.1
    p["bmu"] = jax.random.normal(keys[5], (1, act_dim), jnp.float32) * 0.01
    p["wls"] = jax.random.normal(keys[6], (sizes[2], act_dim), jnp.float32) * 0.1
    p["bls"] = jax.random.normal(keys[7], (1, act_dim), jnp.float32) * 0.01
    return p


def _ref_actor(obs, eps, params):
    """Pure-JAX reference mirroring the torch module's math (f32)."""
    h = jnp.maximum(obs @ params["w1"] + params["b1"], 0.0)
    h = jnp.maximum(h @ params["w2"] + params["b2"], 0.0)
    mu = h @ params["wmu"] + params["bmu"]
    log_std = jnp.clip(h @ params["wls"] + params["bls"], LOG_STD_MIN, LOG_STD_MAX)
    std = jnp.exp(log_std)
    a = mu + std * eps
    z = (a - mu) / std
    logp = jnp.sum(-0.5 * z * z - log_std - 0.5 * jnp.log(2.0 * jnp.pi), axis=-1)
    logp -= jnp.sum(2.0 * (jnp.log(2.0) - a - jax.nn.softplus(-2.0 * a)), axis=-1)
    return jnp.tanh(a), logp


if __name__ == "__main__":
    # Small shapes consistent with the module: batch=8, obs_dim=16, hidden=(32, 32), act_dim=2.
    B, OBS_DIM, HIDDEN, ACT_DIM = 8, 16, (32, 32), 2

    key = jax.random.PRNGKey(0)
    k_obs, k_eps, k_params = jax.random.split(key, 3)

    obs = jax.random.normal(k_obs, (B, OBS_DIM), jnp.float32)
    eps = jax.random.normal(k_eps, (B, ACT_DIM), jnp.float32)  # rsample noise
    params = init_params(k_params, OBS_DIM, HIDDEN, ACT_DIM)

    pi_action, logp_pi = jax.block_until_ready(
        jax.jit(squashed_gaussian_actor)(obs, eps, params)
    )

    # TODO(synk): act_dim==3 branch (sigmoid/tanh/sigmoid per-column), deterministic=True,
    # and the with_logprob_original extra return are not exercised here (act_dim=2 path only).

    assert pi_action.shape == (B, ACT_DIM) and logp_pi.shape == (B,)
    assert bool(jnp.all(jnp.isfinite(pi_action))) and bool(jnp.all(jnp.isfinite(logp_pi)))

    # Correctness vs. pure-JAX reference of the torch math.
    pi_ref, logp_ref = _ref_actor(obs, eps, params)
    assert bool(jnp.allclose(pi_action, pi_ref, rtol=1e-5, atol=1e-5))
    assert bool(jnp.allclose(logp_pi, logp_ref, rtol=1e-5, atol=1e-5))

    print("KERNEL_OK")
</pallas_src>

<mosaic_0001>
module attributes {stable_mosaic.version = 11 : i64} {
  func.func @actor_kernel(%arg0: i32, %arg1: memref<8x16xf32, #tpu.memory_space<vmem>>, %arg2: memref<8x2xf32, #tpu.memory_space<vmem>>, %arg3: memref<16x32xf32, #tpu.memory_space<vmem>>, %arg4: memref<1x32xf32, #tpu.memory_space<vmem>>, %arg5: memref<32x32xf32, #tpu.memory_space<vmem>>, %arg6: memref<1x32xf32, #tpu.memory_space<vmem>>, %arg7: memref<32x4xf32, #tpu.memory_space<vmem>>, %arg8: memref<1x4xf32, #tpu.memory_space<vmem>>, %arg9: memref<8x3xf32, #tpu.memory_space<vmem>>) attributes {dimension_semantics = [#tpu.dimension_semantics<parallel>], iteration_bounds = array<i64: 1>, scalar_prefetch = 0 : i64, scratch_operands = 0 : i64, tpu.core_type = #tpu.core_type<tc>, window_params = [{transform_indices = @transform_0, window_bounds = array<i64: 8, 16>}, {transform_indices = @transform_1, window_bounds = array<i64: 8, 2>}, {pipeline_mode = #tpu.pipeline_mode<synchronous>, transform_indices = @transform_2, window_bounds = array<i64: 16, 32>}, {pipeline_mode = #tpu.pipeline_mode<synchronous>, transform_indices = @transform_3, window_bounds = array<i64: 1, 32>}, {pipeline_mode = #tpu.pipeline_mode<synchronous>, transform_indices = @transform_4, window_bounds = array<i64: 32, 32>}, {pipeline_mode = #tpu.pipeline_mode<synchronous>, transform_indices = @transform_5, window_bounds = array<i64: 1, 32>}, {pipeline_mode = #tpu.pipeline_mode<synchronous>, transform_indices = @transform_6, window_bounds = array<i64: 32, 4>}, {pipeline_mode = #tpu.pipeline_mode<synchronous>, transform_indices = @transform_7, window_bounds = array<i64: 1, 4>}, {transform_indices = @transform_8, window_bounds = array<i64: 8, 3>}]} {
    %c0 = arith.constant 0 : index
    %c0_0 = arith.constant 0 : index
    %0 = vector.load %arg1[%c0, %c0_0] : memref<8x16xf32, #tpu.memory_space<vmem>>, vector<8x16xf32>
    %c0_1 = arith.constant 0 : index
    %c0_2 = arith.constant 0 : index
    %1 = vector.load %arg3[%c0_1, %c0_2] : memref<16x32xf32, #tpu.memory_space<vmem>>, vector<16x32xf32>
    %cst = arith.constant dense<0.000000e+00> : vector<8x32xf32>
    %2 = tpu.matmul %0, %1, %cst {dimension_numbers = #tpu.dot_dimension_numbers<[1], [0], [0], [1], [0, 0, 1, 1], [], []>} : vector<8x16xf32>, vector<16x32xf32>, vector<8x32xf32> -> vector<8x32xf32>
    %c0_3 = arith.constant 0 : index
    %c0_4 = arith.constant 0 : index
    %3 = vector.load %arg4[%c0_3, %c0_4] : memref<1x32xf32, #tpu.memory_space<vmem>>, vector<1x32xf32>
    %4 = vector.broadcast %3 : vector<1x32xf32> to vector<8x32xf32>
    %5 = arith.addf %2, %4 : vector<8x32xf32>
    %cst_5 = arith.constant 0.000000e+00 : f32
    %6 = vector.broadcast %cst_5 : f32 to vector<8x32xf32>
    %7 = arith.maximumf %5, %6 : vector<8x32xf32>
    %c0_6 = arith.constant 0 : index
    %c0_7 = arith.constant 0 : index
    %8 = vector.load %arg5[%c0_6, %c0_7] : memref<32x32xf32, #tpu.memory_space<vmem>>, vector<32x32xf32>
    %cst_8 = arith.constant dense<0.000000e+00> : vector<8x32xf32>
    %9 = tpu.matmul %7, %8, %cst_8 {dimension_numbers = #tpu.dot_dimension_numbers<[1], [0], [0], [1], [0, 0, 1, 1], [], []>} : vector<8x32xf32>, vector<32x32xf32>, vector<8x32xf32> -> vector<8x32xf32>
    %c0_9 = arith.constant 0 : index
    %c0_10 = arith.constant 0 : index
    %10 = vector.load %arg6[%c0_9, %c0_10] : memref<1x32xf32, #tpu.memory_space<vmem>>, vector<1x32xf32>
    %11 = vector.broadcast %10 : vector<1x32xf32> to vector<8x32xf32>
    %12 = arith.addf %9, %11 : vector<8x32xf32>
    %cst_11 = arith.constant 0.000000e+00 : f32
    %13 = vector.broadcast %cst_11 : f32 to vector<8x32xf32>
    %14 = arith.maximumf %12, %13 : vector<8x32xf32>
    %c0_12 = arith.constant 0 : index
    %c0_13 = arith.constant 0 : index
    %15 = vector.load %arg7[%c0_12, %c0_13] : memref<32x4xf32, #tpu.memory_space<vmem>>, vector<32x4xf32>
    %cst_14 = arith.constant dense<0.000000e+00> : vector<8x4xf32>
    %16 = tpu.matmul %14, %15, %cst_14 {dimension_numbers = #tpu.dot_dimension_numbers<[1], [0], [0], [1], [0, 0, 1, 1], [], []>} : vector<8x32xf32>, vector<32x4xf32>, vector<8x4xf32> -> vector<8x4xf32>
    %c0_15 = arith.constant 0 : index
    %c0_16 = arith.constant 0 : index
    %17 = vector.load %arg8[%c0_15, %c0_16] : memref<1x4xf32, #tpu.memory_space<vmem>>, vector<1x4xf32>
    %18 = vector.broadcast %17 : vector<1x4xf32> to vector<8x4xf32>
    %19 = arith.addf %16, %18 : vector<8x4xf32>
    %20 = vector.extract_strided_slice %19 {offsets = [0, 0], sizes = [8, 2], strides = [1, 1]} : vector<8x4xf32> to vector<8x2xf32>
    %21 = vector.extract_strided_slice %19 {offsets = [0, 2], sizes = [8, 2], strides = [1, 1]} : vector<8x4xf32> to vector<8x2xf32>
    %cst_17 = arith.constant -2.000000e+01 : f32
    %cst_18 = arith.constant 2.000000e+00 : f32
    %22 = vector.broadcast %cst_17 : f32 to vector<8x2xf32>
    %23 = arith.maximumf %22, %21 : vector<8x2xf32>
    %24 = vector.broadcast %cst_18 : f32 to vector<8x2xf32>
    %25 = arith.minimumf %24, %23 : vector<8x2xf32>
    %26 = math.exp %25 : vector<8x2xf32>
    %c0_19 = arith.constant 0 : index
    %c0_20 = arith.constant 0 : index
    %27 = vector.load %arg2[%c0_19, %c0_20] : memref<8x2xf32, #tpu.memory_space<vmem>>, vector<8x2xf32>
    %28 = arith.mulf %26, %27 : vector<8x2xf32>
    %29 = arith.addf %20, %28 : vector<8x2xf32>
    %cst_21 = arith.constant -5.000000e-01 : f32
    %30 = vector.broadcast %cst_21 : f32 to vector<8x2xf32>
    %31 = arith.mulf %30, %27 : vector<8x2xf32>
    %32 = arith.mulf %31, %27 : vector<8x2xf32>
    %33 = arith.subf %32, %25 : vector<8x2xf32>
    %cst_22 = arith.constant 6.28318548 : f32
    %34 = math.log %cst_22 : f32
    %cst_23 = arith.constant 5.000000e-01 : f32
    %35 = arith.mulf %cst_23, %34 : f32
    %36 = vector.broadcast %35 : f32 to vector<8x2xf32>
    %37 = arith.subf %33, %36 : vector<8x2xf32>
    %cst_24 = arith.constant dense<0.000000e+00> : vector<8xf32>
    %38 = vector.multi_reduction <add>, %37, %cst_24 [1] : vector<8x2xf32> to vector<8xf32>
    %39 = vector.shape_cast %38 : vector<8xf32> to vector<8x1xf32>
    %cst_25 = arith.constant 2.000000e+00 : f32
    %40 = math.log %cst_25 : f32
    %41 = vector.broadcast %40 : f32 to vector<8x2xf32>
    %42 = arith.subf %41, %29 : vector<8x2xf32>
    %cst_26 = arith.constant -2.000000e+00 : f32
    %43 = vector.broadcast %cst_26 : f32 to vector<8x2xf32>
    %44 = arith.mulf %43, %29 : vector<8x2xf32>
    %cst_27 = arith.constant 0.000000e+00 : f32
    %45 = vector.broadcast %cst_27 : f32 to vector<8x2xf32>
    %46 = arith.maximumf %44, %45 : vector<8x2xf32>
    %47 = math.absf %44 : vector<8x2xf32>
    %cst_28 = arith.constant 0.000000e+00 : f32
    %48 = vector.broadcast %cst_28 : f32 to vector<8x2xf32>
    %49 = arith.subf %48, %47 : vector<8x2xf32>
    %50 = math.exp %49 : vector<8x2xf32>
    %51 = math.log1p %50 : vector<8x2xf32>
    %52 = arith.addf %46, %51 : vector<8x2xf32>
    %53 = arith.subf %42, %52 : vector<8x2xf32>
    %cst_29 = arith.constant 2.000000e+00 : f32
    %54 = vector.broadcast %cst_29 : f32 to vector<8x2xf32>
    %55 = arith.mulf %54, %53 : vector<8x2xf32>
    %cst_30 = arith.constant dense<0.000000e+00> : vector<8xf32>
    %56 = vector.multi_reduction <add>, %55, %cst_30 [1] : vector<8x2xf32> to vector<8xf32>
    %57 = vector.shape_cast %56 : vector<8xf32> to vector<8x1xf32>
    %58 = arith.subf %39, %57 : vector<8x1xf32>
    %59 = math.tanh %29 : vector<8x2xf32>
    %60 = tpu.concatenate %59, %58 in 1 : vector<8x2xf32>, vector<8x1xf32> -> vector<8x3xf32>
    %c0_31 = arith.constant 0 : index
    %c0_32 = arith.constant 0 : index
    %61 = vector.load %arg9[%c0_31, %c0_32] : memref<8x3xf32, #tpu.memory_space<vmem>>, vector<8x3xf32>
    tpu.vector_store %arg9[%c0_31, %c0_32], %60 {strides = array<i32>} : memref<8x3xf32, #tpu.memory_space<vmem>>, vector<8x3xf32>,
    return
  }
  func.func @transform_0(%arg0: i32) -> (i32, i32) {
    %c0_i32 = arith.constant 0 : i32
    %c0_i32_0 = arith.constant 0 : i32
    return %arg0, %c0_i32 : i32, i32
  }
  func.func @transform_1(%arg0: i32) -> (i32, i32) {
    %c0_i32 = arith.constant 0 : i32
    %c0_i32_0 = arith.constant 0 : i32
    return %arg0, %c0_i32 : i32, i32
  }
  func.func @transform_2(%arg0: i32) -> (i32, i32) {
    %c0_i32 = arith.constant 0 : i32
    %c0_i32_0 = arith.constant 0 : i32
    %c0_i32_1 = arith.constant 0 : i32
    return %c0_i32, %c0_i32_0 : i32, i32
  }
  func.func @transform_3(%arg0: i32) -> (i32, i32) {
    %c0_i32 = arith.constant 0 : i32
    %c0_i32_0 = arith.constant 0 : i32
    %c0_i32_1 = arith.constant 0 : i32
    return %c0_i32, %c0_i32_0 : i32, i32
  }
  func.func @transform_4(%arg0: i32) -> (i32, i32) {
    %c0_i32 = arith.constant 0 : i32
    %c0_i32_0 = arith.constant 0 : i32
    %c0_i32_1 = arith.constant 0 : i32
    return %c0_i32, %c0_i32_0 : i32, i32
  }
  func.func @transform_5(%arg0: i32) -> (i32, i32) {
    %c0_i32 = arith.constant 0 : i32
    %c0_i32_0 = arith.constant 0 : i32
    %c0_i32_1 = arith.constant 0 : i32
    return %c0_i32, %c0_i32_0 : i32, i32
  }
  func.func @transform_6(%arg0: i32) -> (i32, i32) {
    %c0_i32 = arith.constant 0 : i32
    %c0_i32_0 = arith.constant 0 : i32
    %c0_i32_1 = arith.constant 0 : i32
    return %c0_i32, %c0_i32_0 : i32, i32
  }
  func.func @transform_7(%arg0: i32) -> (i32, i32) {
    %c0_i32 = arith.constant 0 : i32
    %c0_i32_0 = arith.constant 0 : i32
    %c0_i32_1 = arith.constant 0 : i32
    return %c0_i32, %c0_i32_0 : i32, i32
  }
  func.func @transform_8(%arg0: i32) -> (i32, i32) {
    %c0_i32 = arith.constant 0 : i32
    %c0_i32_0 = arith.constant 0 : i32
    return %arg0, %c0_i32 : i32, i32
  }
}

</mosaic_0001>

<llo_original>
// kernel: squashed_gaussian_actor.1
$region0: #{squashed_gaussian_actor.1}
  #allocation0 [shape = 'u32[]', space=smem, size = 0x4, offset = 0x4, fixed_abs, tag = 'smem constant byte address 0x4 - core index']
  #allocation1 [shape = 'u32[72,128]{1,0:T(1,128)}', space=vmem, size = 0x9000, scoped, tag = 'internal scratch']
  %s0 = inlined_call_operand.hbm [shape: f32[8,16], index: 0, kind: input, shape index: {}]
  %s1 = inlined_call_operand.vmem [shape: f32[8,2], index: 1, kind: input, shape index: {}]
  %s2 = inlined_call_operand.vmem [shape: f32[16,32], index: 2, kind: input, shape index: {}]
  %s3 = inlined_call_operand.vmem [shape: f32[1,32], index: 3, kind: input, shape index: {}]
  %s4 = inlined_call_operand.vmem [shape: f32[32,32], index: 4, kind: input, shape index: {}]
  %s5 = inlined_call_operand.vmem [shape: f32[1,32], index: 5, kind: input, shape index: {}]
  %s6 = inlined_call_operand.vmem [shape: f32[32,4], index: 6, kind: input, shape index: {}]
  %s7 = inlined_call_operand.vmem [shape: f32[1,4], index: 7, kind: input, shape index: {}]
  %s8 = inlined_call_operand.vmem [shape: f32[8,3], index: 8, kind: output, shape index: {}]
  %s9 = sld [smem:[#allocation0]]
  $region46: #{squashed_gaussian_actor.1} parent=0
    _
  %s11 = ssub.s32 1, %s9
  %s12 = scalar_select 0, %s11, %s9
  $region1: #{squashed_gaussian_actor.1} parent=0
    #allocation2 [shape = 'u8[4096]{0}', space=vmem, size = 0x1000, scoped, tag = 'input window, operand 0, single buffered']
    #allocation3 [shape = 's32[1]{0}', space=sflag, size = 0x4, scoped, tag = 'scoped memory for squashed_gaussian_actor.1']
    %13 = vsyncpa [#allocation3], 0
    // Predicated region
    $region2: #{squashed_gaussian_actor.1} parent=1 // pred_check
      _
    $region3: #{squashed_gaussian_actor.1} parent=1 // pred_check_branch
      %15 = sbr.rel (0) target = $region5
    $region4: #{squashed_gaussian_actor.1} parent=1 // pred_region
      %17 = vsyncadd [#allocation3], 0
      %s19 = sshll.u32 %s0, 4
      %s20 = int_to_ptr.hbm [resolvable:$true] %s19
      %s21 = sshll.u32 [#allocation2], 4
      %s22 = int_to_ptr.vmem [resolvable:$true] %s21
      %24 = dma.hbm_to_vmem [thread:$0]  %s20, 128, %s22, [#allocation3]
    $region5: #{squashed_gaussian_actor.1} parent=1 // pred_fallthru
      _
    // Predicated region
    $region6: #{squashed_gaussian_actor.1} parent=1 // pred_check
      _
    $region7: #{squashed_gaussian_actor.1} parent=1 // pred_check_branch
      %26 = sbr.rel (0) target = $region9
    $region8: #{squashed_gaussian_actor.1} parent=1 // pred_region
      _
    $region9: #{squashed_gaussian_actor.1} parent=1 // pred_fallthru
      _
    // Predicated region
    $region10: #{squashed_gaussian_actor.1} parent=1 // pred_check
      _
    $region11: #{squashed_gaussian_actor.1} parent=1 // pred_check_branch
      %28 = sbr.rel (0) target = $region13
    $region12: #{squashed_gaussian_actor.1} parent=1 // pred_region
      _
    $region13: #{squashed_gaussian_actor.1} parent=1 // pred_fallthru
      _
    // Predicated region
    $region14: #{squashed_gaussian_actor.1} parent=1 // pred_check
      _
    $region15: #{squashed_gaussian_actor.1} parent=1 // pred_check_branch
      %30 = sbr.rel (0) target = $region17
    $region16: #{squashed_gaussian_actor.1} parent=1 // pred_region
      _
    $region17: #{squashed_gaussian_actor.1} parent=1 // pred_fallthru
      _
    // Predicated region
    $region18: #{squashed_gaussian_actor.1} parent=1 // pred_check
      _
    $region19: #{squashed_gaussian_actor.1} parent=1 // pred_check_branch
      %32 = sbr.rel (0) target = $region21
    $region20: #{squashed_gaussian_actor.1} parent=1 // pred_region
      _
    $region21: #{squashed_gaussian_actor.1} parent=1 // pred_fallthru
      _
    // Predicated region
    $region22: #{squashed_gaussian_actor.1} parent=1 // pred_check
      _
    $region23: #{squashed_gaussian_actor.1} parent=1 // pred_check_branch
      %34 = sbr.rel (0) target = $region25
    $region24: #{squashed_gaussian_actor.1} parent=1 // pred_region
      _
    $region25: #{squashed_gaussian_actor.1} parent=1 // pred_fallthru
      _
    // Predicated region
    $region26: #{squashed_gaussian_actor.1} parent=1 // pred_check
      _
    $region27: #{squashed_gaussian_actor.1} parent=1 // pred_check_branch
      %36 = sbr.rel (0) target = $region29
    $region28: #{squashed_gaussian_actor.1} parent=1 // pred_region
      _
    $region29: #{squashed_gaussian_actor.1} parent=1 // pred_fallthru
      _
    // Predicated region
    $region30: #{squashed_gaussian_actor.1} parent=1 // pred_check
      _
    $region31: #{squashed_gaussian_actor.1} parent=1 // pred_check_branch
      %38 = sbr.rel (0) target = $region33
    $region32: #{squashed_gaussian_actor.1} parent=1 // pred_region
      _
    $region33: #{squashed_gaussian_actor.1} parent=1 // pred_fallthru
      _
    // Predicated region
    $region34: #{squashed_gaussian_actor.1} parent=1 // pred_check
      _
    $region35: #{squashed_gaussian_actor.1} parent=1 // pred_check_branch
      %40 = sbr.rel (0) target = $region37
    $region36: #{squashed_gaussian_actor.1} parent=1 // pred_region
      %42 = dma.done [#allocation3], 128
    $region37: #{squashed_gaussian_actor.1} parent=1 // pred_fallthru
      _
    %v43 = vld [vmem:[#allocation2] sm:$0xff]
    %v44 = vld [vmem:[%s2] sm:$0xff]
    %v45 = vld [vmem:[%s2 + $0x8] sm:$0xff]
    %v46 = vld [vmem:[%s3] sm:$0x1]
    %v48 = vperm.slane %v46, 0
    %vm50 = vcmask 130048
    %v52 = vsel %vm50, %v43, 0
    %54 = vmatpush.msra.mxu0 0.0
    %55 = vmatpush.msra.mxu0 0.0
    %56 = vmatpush.msra.mxu0 0.0
    %57 = vmatpush.msra.mxu0 0.0
    %58 = vmatpush.msra.mxu0 0.0
    %59 = vmatpush.msra.mxu0 0.0
    %60 = vmatpush.msra.mxu0 0.0
    %61 = vmatpush.msra.mxu0 0.0
    %62 = vmatpush.msra.mxu0 0.0
    %63 = vmatpush.msra.mxu0 0.0
    %64 = vmatpush.msra.mxu0 0.0
    %65 = vmatpush.msra.mxu0 0.0
    %66 = vmatpush.msra.mxu0 0.0
    %67 = vmatpush.msra.mxu0 0.0
    %68 = vmatpush.msra.mxu0 %v45
    %69 = vmatpush.msra.mxu0 %v44
    %70 = vmatmul.f32.gmra.mxu0 %v52
    %v71 = vpop.f32.mrf.mxu0
    %v72 = vadd.f32 %v48, %v71
    %73 = vdwg.mxu0
    %v74 = vmax.f32 %v72, 0.0
    %v75 = vld [vmem:[%s4] sm:$0xff]
    %v76 = vld [vmem:[%s4 + $0x8] sm:$0xff]
    %v77 = vld [vmem:[%s4 + $0x10] sm:$0xff]
    %v78 = vld [vmem:[%s4 + $0x18] sm:$0xff]
    %v79 = vld [vmem:[%s5] sm:$0x1]
    %v81 = vperm.slane %v79, 0
    %vm83 = vcmask 261120
    %v85 = vsel %vm83, %v74, 0
    %87 = vmatpush.msra.mxu0 0.0
    %88 = vmatpush.msra.mxu0 0.0
    %89 = vmatpush.msra.mxu0 0.0
    %90 = vmatpush.msra.mxu0 0.0
    %91 = vmatpush.msra.mxu0 0.0
    %92 = vmatpush.msra.mxu0 0.0
    %93 = vmatpush.msra.mxu0 0.0
    %94 = vmatpush.msra.mxu0 0.0
    %95 = vmatpush.msra.mxu0 0.0
    %96 = vmatpush.msra.mxu0 0.0
    %97 = vmatpush.msra.mxu0 0.0
    %98 = vmatpush.msra.mxu0 0.0
    %99 = vmatpush.msra.mxu0 %v78
    %100 = vmatpush.msra.mxu0 %v77
    %101 = vmatpush.msra.mxu0 %v76
    %102 = vmatpush.msra.mxu0 %v75
    %103 = vmatmul.f32.gmra.mxu0 %v85
    %v104 = vpop.f32.mrf.mxu0
    %v105 = vadd.f32 %v81, %v104
    %106 = vdwg.mxu0
    %v107 = vmax.f32 %v105, 0.0
    %v108 = vld [vmem:[%s6] sm:$0xff]
    %v109 = vld [vmem:[%s6 + $0x8] sm:$0xff]
    %v110 = vld [vmem:[%s6 + $0x10] sm:$0xff]
    %v111 = vld [vmem:[%s6 + $0x18] sm:$0xff]
    %v112 = vld [vmem:[%s7] sm:$0x1]
    %v114 = vperm.slane %v112, 0
    %v117 = vsel %vm83, %v107, 0
    %119 = vmatpush.msra.mxu0 0.0
    %120 = vmatpush.msra.mxu0 0.0
    %121 = vmatpush.msra.mxu0 0.0
    %122 = vmatpush.msra.mxu0 0.0
    %123 = vmatpush.msra.mxu0 0.0
    %124 = vmatpush.msra.mxu0 0.0
    %125 = vmatpush.msra.mxu0 0.0
    %126 = vmatpush.msra.mxu0 0.0
    %127 = vmatpush.msra.mxu0 0.0
    %128 = vmatpush.msra.mxu0 0.0
    %129 = vmatpush.msra.mxu0 0.0
    %130 = vmatpush.msra.mxu0 0.0
    %131 = vmatpush.msra.mxu0 %v111
    %132 = vmatpush.msra.mxu0 %v110
    %133 = vmatpush.msra.mxu0 %v109
    %134 = vmatpush.msra.mxu0 %v108
    %135 = vmatmul.f32.gmra.mxu0 %v117
    %v136 = vpop.f32.mrf.mxu0
    %v137 = vadd.f32 %v114, %v136
    %138 = vdwg.mxu0
    %v139 = vmax.f32 %v137, -20.0
    %v140 = vmin.f32 %v139, 2.0
    %v141 = vmul.f32 %v140, 1.442695
    %v142 = vpow.pop %v141
    %v143 = vld [vmem:[%s1] sm:$0xff]
    %145 = vrot.lane.b32.xlu0 %v143, 2
    %v146 = vpop.permute.xlu0 %145
    %v148 = vmul.f32 %v142, %v146
    %150 = vrot.lane.b32.xlu0 %v148, 126
    %v151 = vpop.permute.xlu0 %150
    %v153 = vadd.f32 %v137, %v151
    %v154 = vmul.f32 %v143, -0.5
    %v155 = vmul.f32 %v154, %v143
    %157 = vrot.lane.b32.xlu0 %v140, 126
    %v158 = vpop.permute.xlu0 %157
    %v160 = vsub.f32 %v155, %v158
    %v161 = vsub.f32 %v160, 0.9189385
    %vm162 = vcmask 15360
    %v163 = vsel %vm162, %v161, 0.0
    %164 = vadd.xlane.f32.xlu0 %v163
    %v165 = vpop.xlane.xlu0 %164
    %v166 = vsub.f32 0.6931472, %v153
    %v167 = vmul.f32 %v153, -2.0
    %v168 = vmax.f32 %v167, 0.0
    %v169 = vand.u32 2147483647, %v167
    %v170 = vsub.f32 0.0, %v169
    %v171 = vmul.f32 %v170, 1.442695
    %v172 = vpow.pop %v171
    %v173 = vadd.f32 %v172, 1.0
    %v174 = vlog2.pop %v173
    %v175 = vmul.f32 %v174, 0.6931472
    %v176 = vmul.f32 -0.5, %v172
    %v177 = vadd.f32 %v176, 1.0
    %v178 = vmul.f32 %v177, %v172
    %v179 = vand.u32 2147483647, %v172
    %vm180 = vcmp.lt.f32.partialorder %v179, 0.0004427343
    %v181 = vsel %vm180, %v178, %v175
    %v182 = vadd.f32 %v168, %v181
    %v183 = vsub.f32 %v166, %v182
    %v184 = vmul.f32 %v183, 2.0
    %v185 = vsel %vm162, %v184, 0.0
    %186 = vadd.xlane.f32.xlu0 %v185
    %v187 = vpop.xlane.xlu0 %186
    %v188 = vsub.f32 %v165, %v187
    %v189 = vtanh.pop %v153
    %v190 = vsel %vm162, %v189, %v188
    %vm191 = vcmask 23552
    %192 = vst.msk [vmem:[%s8] sm:$0xff] %vm191, %v190
    // Predicated region
    $region38: #{squashed_gaussian_actor.1} parent=1 // pred_check
      _
    $region39: #{squashed_gaussian_actor.1} parent=1 // pred_check_branch
      %194 = sbr.rel (0) target = $region41
    $region40: #{squashed_gaussian_actor.1} parent=1 // pred_region
      _
    $region41: #{squashed_gaussian_actor.1} parent=1 // pred_fallthru
      _
    // Predicated region
    $region42: #{squashed_gaussian_actor.1} parent=1 // pred_check
      _
    $region43: #{squashed_gaussian_actor.1} parent=1 // pred_check_branch
      %196 = sbr.rel (0) target = $region45
    $region44: #{squashed_gaussian_actor.1} parent=1 // pred_region
      _
    $region45: #{squashed_gaussian_actor.1} parent=1 // pred_fallthru
      _
    %197 = vsyncpa [#allocation3], 1

</llo_original>
